<compile_context>
chip_gen: v6e
topology: v6e:2x2x1
jax: 0.10.0
libtpu: 0.0.40
codegen_flags: <defaults>
</compile_context>

<pallas_src>
import math

import jax
import jax.numpy as jnp
from jax.experimental import pallas as pl
from jax.experimental.pallas import tpu as pltpu


def _round_up(x, m):
    return (x + m - 1) // m * m


def _pick_tile_k(in_features, max_tile=512):
    """Largest multiple-of-128 tile <= max_tile that divides the 128-padded K."""
    base = _round_up(in_features, 128)
    cands = [t for t in range(128, min(max_tile, base) + 1, 128) if base % t == 0]
    return max(cands), base


def _pick_tile_n(out_features, max_tile=512):
    """Like _pick_tile_k but prefers >=2 tiles (>=256 wide) so the parallel N
    axis can shard across both TensorCores on v7x (harmless on 1-TC chips)."""
    base = _round_up(out_features, 128)
    cands = [t for t in range(128, min(max_tile, base) + 1, 128) if base % t == 0]
    two = [t for t in cands if base // t >= 2 and t >= 256]
    return (max(two) if two else max(cands)), base


# ---------------------------------------------------------------------------
# Kernels
# ---------------------------------------------------------------------------
def _noisy_train_kernel(x_ref, ein_ref, wmu_ref, wsig_ref, eout_ref, b_ref,
                        o_ref):
    """Training path (factored noise, algebraic form).

    x_ref   : (B, TK) f32       ein_ref          : (1, TK) f32
    wmu_ref : (TK, TN)          wsig_ref         : (TK, TN)   (pre-transposed K,N)
    eout_ref: (1, TN) f32       b_ref            : (1, TN) f32
    o_ref   : (B, TN) f32  — resident accumulator across the K grid axis.
    """
    k = pl.program_id(1)

    @pl.when(k == 0)
    def _():
        o_ref[...] = jnp.zeros_like(o_ref)

    x = x_ref[...]
    xw = x.astype(wmu_ref.dtype)                       # cast once for the MXU
    xs = (x * ein_ref[...]).astype(wsig_ref.dtype)     # x * eps_in  (tiny VPU)

    # y += x @ Wmu + ((x*eps_in) @ Wsig) * eps_out  — two MXU dots, f32 accum.
    o_ref[...] += (
        jnp.dot(xw, wmu_ref[...], preferred_element_type=jnp.float32)
        + jnp.dot(xs, wsig_ref[...], preferred_element_type=jnp.float32)
        * eout_ref[...]
    )

    @pl.when(k == pl.num_programs(1) - 1)
    def _():
        o_ref[...] += b_ref[...]


def _noisy_eval_kernel(x_ref, wmu_ref, b_ref, o_ref):
    """Eval path: mu-only weights; sigma / epsilon are never DMA'd."""
    k = pl.program_id(1)

    @pl.when(k == 0)
    def _():
        o_ref[...] = jnp.zeros_like(o_ref)

    o_ref[...] += jnp.dot(x_ref[...].astype(wmu_ref.dtype), wmu_ref[...],
                          preferred_element_type=jnp.float32)

    @pl.when(k == pl.num_programs(1) - 1)
    def _():
        o_ref[...] += b_ref[...]


# ---------------------------------------------------------------------------
# One-time parameter packing (transpose / pad / optional bf16) — hot-path free.
# ---------------------------------------------------------------------------
def pack_noisy_linear(params, *, max_tile=512, weight_dtype=jnp.float32):
    """Pre-transpose weights to (K, N), pad to tile-divisible shapes, fold the
    bias terms, and pick tile sizes. Call once at setup; reuse every forward."""
    out_f, in_f = params["weight_mu"].shape
    tile_k, Kp = _pick_tile_k(in_f, max_tile)
    tile_n, Np = _pick_tile_n(out_f, max_tile)

    def pad2(a, r, c, dtype):
        return jnp.zeros((r, c), dtype).at[:a.shape[0], :a.shape[1]].set(
            a.astype(dtype))

    bias_train = params["bias_mu"] + params["bias_sigma"] * params["bias_epsilon"]

    return {
        "in_features": in_f,
        "out_features": out_f,
        "Kp": Kp, "Np": Np, "tile_k": tile_k, "tile_n": tile_n,
        # Weights in canonical (K, N) MXU layout, padded, optionally bf16.
        "wmu_t": pad2(params["weight_mu"].T, Kp, Np, weight_dtype),
        "wsig_t": pad2(params["weight_sigma"].T, Kp, Np, weight_dtype),
        # Factored noise vectors (the full (out,in) epsilon never enters the kernel).
        "eps_in": pad2(params["eps_in"].reshape(1, in_f), 1, Kp, jnp.float32),
        "eps_out": pad2(params["eps_out"].reshape(1, out_f), 1, Np, jnp.float32),
        # Pre-folded biases for both modes.
        "bias_train": pad2(bias_train.reshape(1, out_f), 1, Np, jnp.float32),
        "bias_eval": pad2(params["bias_mu"].reshape(1, out_f), 1, Np, jnp.float32),
    }


# ---------------------------------------------------------------------------
# Forward wrapper
# ---------------------------------------------------------------------------
def noisy_linear(x, packed, *, training=True):
    """x: (B, in_features). packed: dict from pack_noisy_linear()."""
    B, in_f = x.shape
    assert in_f == packed["in_features"]
    out_f = packed["out_features"]
    Kp, Np = packed["Kp"], packed["Np"]
    tile_k, tile_n = packed["tile_k"], packed["tile_n"]

    # f32 blocks need sublane 8; bf16 x would need 16.
    Bp = _round_up(B, 8 if x.dtype == jnp.float32 else 16)
    xp = jnp.zeros((Bp, Kp), x.dtype).at[:B, :in_f].set(x)

    grid = (Np // tile_n, Kp // tile_k)        # (parallel N, reduction K last)

    # TODO(synk): for very large batches, make x a fully-resident (Bp, Kp) block
    #             (index_map (0,0)) and slice K in-kernel to avoid re-fetching it
    #             once per N tile; at small B this traffic is noise.
    x_spec = pl.BlockSpec((Bp, tile_k), lambda j, k: (0, k))
    w_spec = pl.BlockSpec((tile_k, tile_n), lambda j, k: (k, j))
    ein_spec = pl.BlockSpec((1, tile_k), lambda j, k: (0, k))
    eout_spec = pl.BlockSpec((1, tile_n), lambda j, k: (0, j))
    b_spec = pl.BlockSpec((1, tile_n), lambda j, k: (0, j))
    o_spec = pl.BlockSpec((Bp, tile_n), lambda j, k: (0, j))

    cp = pltpu.CompilerParams(dimension_semantics=("parallel", "arbitrary"))
    out_shape = jax.ShapeDtypeStruct((Bp, Np), jnp.float32)   # f32 accum output

    if training:
        out = pl.pallas_call(
            _noisy_train_kernel,
            out_shape=out_shape,
            grid=grid,
            in_specs=[x_spec, ein_spec, w_spec, w_spec, eout_spec, b_spec],
            out_specs=o_spec,
            compiler_params=cp,
        )(xp, packed["eps_in"], packed["wmu_t"], packed["wsig_t"],
          packed["eps_out"], packed["bias_train"])
    else:
        out = pl.pallas_call(
            _noisy_eval_kernel,
            out_shape=out_shape,
            grid=grid,
            in_specs=[x_spec, w_spec, b_spec],
            out_specs=o_spec,
            compiler_params=cp,
        )(xp, packed["wmu_t"], packed["bias_eval"])

    return out[:B, :out_f].astype(x.dtype)


# ---------------------------------------------------------------------------
# Parameter / noise initialization (plain JAX, matches the PyTorch module)
# ---------------------------------------------------------------------------
def _scale_noise(key, size):
    """torch: x = randn(size); return x.sign() * x.abs().sqrt()"""
    x = jax.random.normal(key, (size,), dtype=jnp.float32)
    return jnp.sign(x) * jnp.sqrt(jnp.abs(x))


def init_noisy_linear(key, in_features, out_features, std_init=0.5):
    """Equivalent of NoisyLinear.__init__ / reset_parameters / reset_noise."""
    k_wmu, k_bmu, k_ein, k_eout = jax.random.split(key, 4)
    mu_range = 1.0 / math.sqrt(in_features)

    weight_mu = jax.random.uniform(
        k_wmu, (out_features, in_features), jnp.float32, -mu_range, mu_range)
    weight_sigma = jnp.full((out_features, in_features),
                            std_init / math.sqrt(in_features), jnp.float32)
    bias_mu = jax.random.uniform(
        k_bmu, (out_features,), jnp.float32, -mu_range, mu_range)
    bias_sigma = jnp.full((out_features,),
                          std_init / math.sqrt(out_features), jnp.float32)

    eps_in = _scale_noise(k_ein, in_features)
    eps_out = _scale_noise(k_eout, out_features)
    weight_epsilon = jnp.outer(eps_out, eps_in)   # epsilon_out.ger(epsilon_in)

    return {
        "weight_mu": weight_mu,
        "weight_sigma": weight_sigma,
        "weight_epsilon": weight_epsilon,   # reference-check only (kernel never reads it)
        "eps_in": eps_in,                   # factored noise used by the kernel
        "eps_out": eps_out,
        "bias_mu": bias_mu,
        "bias_sigma": bias_sigma,
        "bias_epsilon": eps_out,
    }


def _reference(x, p, training=True):
    if training:
        w = p["weight_mu"] + p["weight_sigma"] * p["weight_epsilon"]
        b = p["bias_mu"] + p["bias_sigma"] * p["bias_epsilon"]
    else:
        w = p["weight_mu"]
        b = p["bias_mu"]
    return x @ w.T + b


if __name__ == "__main__":
    key = jax.random.PRNGKey(0)
    k_param, k_x, k_param2, k_x2 = jax.random.split(key, 4)

    # Case 1: tile-aligned shapes (2 N tiles of 256 -> exercises the parallel axis).
    batch, in_features, out_features = 8, 256, 512
    params = init_noisy_linear(k_param, in_features, out_features, std_init=0.5)
    packed = pack_noisy_linear(params)                      # one-time repack (f32)
    x = jax.random.normal(k_x, (batch, in_features), dtype=jnp.float32)

    y_train = jax.block_until_ready(noisy_linear(x, packed, training=True))
    y_eval = jax.block_until_ready(noisy_linear(x, packed, training=False))
    assert y_train.shape == (batch, out_features)
    assert jnp.allclose(y_train, _reference(x, params, True), atol=1e-4, rtol=1e-4)
    assert jnp.allclose(y_eval, _reference(x, params, False), atol=1e-4, rtol=1e-4)

    # Case 2: unaligned shapes (exercises the padding path).
    b2, inf2, outf2 = 5, 100, 72
    params2 = init_noisy_linear(k_param2, inf2, outf2, std_init=0.5)
    packed2 = pack_noisy_linear(params2)
    x2 = jax.random.normal(k_x2, (b2, inf2), dtype=jnp.float32)

    y2_train = jax.block_until_ready(noisy_linear(x2, packed2, training=True))
    y2_eval = jax.block_until_ready(noisy_linear(x2, packed2, training=False))
    assert y2_train.shape == (b2, outf2)
    assert jnp.allclose(y2_train, _reference(x2, params2, True), atol=1e-4, rtol=1e-4)
    assert jnp.allclose(y2_eval, _reference(x2, params2, False), atol=1e-4, rtol=1e-4)

    # Case 3: bf16 weight streaming (halves weight HBM bytes; f32 accumulation).
    packed_bf16 = pack_noisy_linear(params, weight_dtype=jnp.bfloat16)
    y3_train = jax.block_until_ready(noisy_linear(x, packed_bf16, training=True))
    y3_eval = jax.block_until_ready(noisy_linear(x, packed_bf16, training=False))
    assert jnp.allclose(y3_train, _reference(x, params, True), atol=3e-2, rtol=3e-2)
    assert jnp.allclose(y3_eval, _reference(x, params, False), atol=3e-2, rtol=3e-2)

    print("KERNEL_OK")
</pallas_src>

<mosaic_0001>
module attributes {stable_mosaic.version = 11 : i64} {
  func.func @_noisy_train_kernel(%arg0: i32, %arg1: i32, %arg2: memref<8x256xf32, #tpu.memory_space<vmem>>, %arg3: memref<1x256xf32, #tpu.memory_space<vmem>>, %arg4: memref<256x256xf32, #tpu.memory_space<vmem>>, %arg5: memref<256x256xf32, #tpu.memory_space<vmem>>, %arg6: memref<1x256xf32, #tpu.memory_space<vmem>>, %arg7: memref<1x256xf32, #tpu.memory_space<vmem>>, %arg8: memref<8x256xf32, #tpu.memory_space<vmem>>) attributes {dimension_semantics = [#tpu.dimension_semantics<parallel>, #tpu.dimension_semantics<arbitrary>], iteration_bounds = array<i64: 2, 1>, scalar_prefetch = 0 : i64, scratch_operands = 0 : i64, tpu.core_type = #tpu.core_type<tc>, window_params = [{transform_indices = @transform_0, window_bounds = array<i64: 8, 256>}, {transform_indices = @transform_1, window_bounds = array<i64: 1, 256>}, {transform_indices = @transform_2, window_bounds = array<i64: 256, 256>}, {transform_indices = @transform_3, window_bounds = array<i64: 256, 256>}, {transform_indices = @transform_4, window_bounds = array<i64: 1, 256>}, {transform_indices = @transform_5, window_bounds = array<i64: 1, 256>}, {transform_indices = @transform_6, window_bounds = array<i64: 8, 256>}]} {
    %c0_i32 = arith.constant 0 : i32
    %0 = arith.cmpi eq, %arg1, %c0_i32 : i32
    %1 = arith.extui %0 : i1 to i32
    %c0_i32_0 = arith.constant 0 : i32
    %2 = arith.cmpi ne, %1, %c0_i32_0 : i32
    scf.if %2 {
      %cst_17 = arith.constant 0.000000e+00 : f32
      %21 = vector.broadcast %cst_17 : f32 to vector<8x256xf32>
      %c0_18 = arith.constant 0 : index
      %c0_19 = arith.constant 0 : index
      %22 = vector.load %arg8[%c0_18, %c0_19] : memref<8x256xf32, #tpu.memory_space<vmem>>, vector<8x256xf32>
      tpu.vector_store %arg8[%c0_18, %c0_19], %21 {strides = array<i32>} : memref<8x256xf32, #tpu.memory_space<vmem>>, vector<8x256xf32>,
    } else {
    }
    %c0 = arith.constant 0 : index
    %c0_1 = arith.constant 0 : index
    %3 = vector.load %arg2[%c0, %c0_1] : memref<8x256xf32, #tpu.memory_space<vmem>>, vector<8x256xf32>
    %c0_2 = arith.constant 0 : index
    %c0_3 = arith.constant 0 : index
    %4 = vector.load %arg3[%c0_2, %c0_3] : memref<1x256xf32, #tpu.memory_space<vmem>>, vector<1x256xf32>
    %5 = vector.broadcast %4 : vector<1x256xf32> to vector<8x256xf32>
    %6 = arith.mulf %3, %5 : vector<8x256xf32>
    %c0_4 = arith.constant 0 : index
    %c0_5 = arith.constant 0 : index
    %7 = vector.load %arg8[%c0_4, %c0_5] : memref<8x256xf32, #tpu.memory_space<vmem>>, vector<8x256xf32>
    %c0_6 = arith.constant 0 : index
    %c0_7 = arith.constant 0 : index
    %8 = vector.load %arg4[%c0_6, %c0_7] : memref<256x256xf32, #tpu.memory_space<vmem>>, vector<256x256xf32>
    %cst = arith.constant dense<0.000000e+00> : vector<8x256xf32>
    %9 = tpu.matmul %3, %8, %cst {dimension_numbers = #tpu.dot_dimension_numbers<[1], [0], [0], [1], [0, 0, 1, 1], [], []>} : vector<8x256xf32>, vector<256x256xf32>, vector<8x256xf32> -> vector<8x256xf32>
    %c0_8 = arith.constant 0 : index
    %c0_9 = arith.constant 0 : index
    %10 = vector.load %arg5[%c0_8, %c0_9] : memref<256x256xf32, #tpu.memory_space<vmem>>, vector<256x256xf32>
    %cst_10 = arith.constant dense<0.000000e+00> : vector<8x256xf32>
    %11 = tpu.matmul %6, %10, %cst_10 {dimension_numbers = #tpu.dot_dimension_numbers<[1], [0], [0], [1], [0, 0, 1, 1], [], []>} : vector<8x256xf32>, vector<256x256xf32>, vector<8x256xf32> -> vector<8x256xf32>
    %c0_11 = arith.constant 0 : index
    %c0_12 = arith.constant 0 : index
    %12 = vector.load %arg6[%c0_11, %c0_12] : memref<1x256xf32, #tpu.memory_space<vmem>>, vector<1x256xf32>
    %13 = vector.broadcast %12 : vector<1x256xf32> to vector<8x256xf32>
    %14 = arith.mulf %11, %13 : vector<8x256xf32>
    %15 = arith.addf %9, %14 : vector<8x256xf32>
    %16 = arith.addf %7, %15 : vector<8x256xf32>
    %c0_13 = arith.constant 0 : index
    %c0_14 = arith.constant 0 : index
    %17 = vector.load %arg8[%c0_13, %c0_14] : memref<8x256xf32, #tpu.memory_space<vmem>>, vector<8x256xf32>
    tpu.vector_store %arg8[%c0_13, %c0_14], %16 {strides = array<i32>} : memref<8x256xf32, #tpu.memory_space<vmem>>, vector<8x256xf32>,
    %c0_i32_15 = arith.constant 0 : i32
    %18 = arith.cmpi eq, %arg1, %c0_i32_15 : i32
    %19 = arith.extui %18 : i1 to i32
    %c0_i32_16 = arith.constant 0 : i32
    %20 = arith.cmpi ne, %19, %c0_i32_16 : i32
    scf.if %20 {
      %c0_17 = arith.constant 0 : index
      %c0_18 = arith.constant 0 : index
      %21 = vector.load %arg8[%c0_17, %c0_18] : memref<8x256xf32, #tpu.memory_space<vmem>>, vector<8x256xf32>
      %c0_19 = arith.constant 0 : index
      %c0_20 = arith.constant 0 : index
      %22 = vector.load %arg7[%c0_19, %c0_20] : memref<1x256xf32, #tpu.memory_space<vmem>>, vector<1x256xf32>
      %23 = vector.broadcast %22 : vector<1x256xf32> to vector<8x256xf32>
      %24 = arith.addf %21, %23 : vector<8x256xf32>
      %c0_21 = arith.constant 0 : index
      %c0_22 = arith.constant 0 : index
      %25 = vector.load %arg8[%c0_21, %c0_22] : memref<8x256xf32, #tpu.memory_space<vmem>>, vector<8x256xf32>
      tpu.vector_store %arg8[%c0_21, %c0_22], %24 {strides = array<i32>} : memref<8x256xf32, #tpu.memory_space<vmem>>, vector<8x256xf32>,
    } else {
    }
    return
  }
  func.func @transform_0(%arg0: i32, %arg1: i32) -> (i32, i32) {
    %c0_i32 = arith.constant 0 : i32
    %c0_i32_0 = arith.constant 0 : i32
    return %c0_i32, %arg1 : i32, i32
  }
  func.func @transform_1(%arg0: i32, %arg1: i32) -> (i32, i32) {
    %c0_i32 = arith.constant 0 : i32
    %c0_i32_0 = arith.constant 0 : i32
    return %c0_i32, %arg1 : i32, i32
  }
  func.func @transform_2(%arg0: i32, %arg1: i32) -> (i32, i32) {
    %c0_i32 = arith.constant 0 : i32
    return %arg1, %arg0 : i32, i32
  }
  func.func @transform_3(%arg0: i32, %arg1: i32) -> (i32, i32) {
    %c0_i32 = arith.constant 0 : i32
    return %arg1, %arg0 : i32, i32
  }
  func.func @transform_4(%arg0: i32, %arg1: i32) -> (i32, i32) {
    %c0_i32 = arith.constant 0 : i32
    %c0_i32_0 = arith.constant 0 : i32
    return %c0_i32, %arg0 : i32, i32
  }
  func.func @transform_5(%arg0: i32, %arg1: i32) -> (i32, i32) {
    %c0_i32 = arith.constant 0 : i32
    %c0_i32_0 = arith.constant 0 : i32
    return %c0_i32, %arg0 : i32, i32
  }
  func.func @transform_6(%arg0: i32, %arg1: i32) -> (i32, i32) {
    %c0_i32 = arith.constant 0 : i32
    %c0_i32_0 = arith.constant 0 : i32
    return %c0_i32, %arg0 : i32, i32
  }
}

</mosaic_0001>

<llo_original>
// kernel: tpu_custom_call.1
$region0: #{tpu_custom_call.1}
  #allocation0 [shape = 'u32[]', space=smem, size = 0x4, offset = 0x4, fixed_abs, tag = 'smem constant byte address 0x4 - core index']
  #allocation1 [shape = 'u32[144,128]{1,0:T(1,128)}', space=vmem, size = 0x12000, scoped, tag = 'internal scratch']
  %s0 = inlined_call_operand.hbm [shape: f32[8,256], index: 0, kind: input, shape index: {}]
  %s1 = inlined_call_operand.hbm [shape: f32[1,256], index: 1, kind: input, shape index: {}]
  %s2 = inlined_call_operand.hbm [shape: f32[256,512], index: 2, kind: input, shape index: {}]
  %s3 = inlined_call_operand.hbm [shape: f32[256,512], index: 3, kind: input, shape index: {}]
  %s4 = inlined_call_operand.vmem [shape: f32[1,512], index: 4, kind: input, shape index: {}]
  %s5 = inlined_call_operand.vmem [shape: f32[1,512], index: 5, kind: input, shape index: {}]
  %s6 = inlined_call_operand.hbm [shape: f32[8,512], index: 6, kind: output, shape index: {}]
  %s7 = sld [smem:[#allocation0]]
  $region81: #{tpu_custom_call.1} parent=0
    _
  %s9 = ssub.s32 1, %s7
  %s10 = scalar_select 0, %s9, %s7
  $region1: #{tpu_custom_call.1} parent=0
    #allocation2 [shape = 'u8[8192]{0}', space=vmem, size = 0x2000, scoped, tag = 'input window, operand 0, single buffered']
    #allocation3 [shape = 's32[2]{0}', space=sflag, size = 0x8, scoped, tag = 'scoped memory for tpu_custom_call.1']
    #allocation4 [shape = 's32[2]{0}', space=sflag, size = 0x8, scoped, tag = 'scoped memory for tpu_custom_call.1']
    #allocation5 [shape = 'u8[1024]{0}', space=vmem, size = 0x400, scoped, tag = 'input window, operand 1, single buffered']
    #allocation6 [shape = 's32[1]{0}', space=sflag, size = 0x4, scoped, tag = 'scoped memory for tpu_custom_call.1']
    #allocation7 [shape = 'u8[524288]{0}', space=vmem, size = 0x80000, scoped, tag = 'input window, operand 2']
    #allocation8 [shape = 'u8[524288]{0}', space=vmem, size = 0x80000, scoped, tag = 'input window, operand 3']
    #allocation9 [shape = 'u8[16384]{0}', space=vmem, size = 0x4000, scoped, tag = 'output window, operand 0']
    %11 = vsyncpa [#allocation3], 0
    %12 = vsyncpa [#allocation6], 0
    %13 = vsyncpa [#allocation4], 0
    %s14 = scalar_lea.sflag [#allocation4], 1
    %15 = vsyncpa %s14, 0
    loop: start=0, step=1, limit=4
    $region2: #{tpu_custom_call.1} parent=1 // loop_pre_header
      _
    $region3: #{tpu_custom_call.1} parent=1 // loop_header
      %s17 = sphi 0, %s21
      %p18 = scmp.ge.s32.totalorder %s17, 4
      %s24 = sphi 0, %s36
      %s25 = sphi 0, %s32
      %s26 = sphi 0, %s24
      %s27 = sphi 0, %s25
      %s28 = sphi 0, %s26
      %s29 = sphi 0, %s27
      %s39 = sphi 0, %s41
      %s42 = sphi 0, %s39
      %s43 = sphi 0, %s42
      %s59 = sphi 0, %s43
      %s65 = sphi 0, %s67
      %s68 = sphi 0, %s65
      %s69 = sphi 0, %s68
      %s85 = sphi 0, %s69
      %s93 = sphi 0, %s95
      %s96 = sphi 0, %s93
      %s97 = sphi 0, %s96
      %s113 = sphi 0, %s97
      %s121 = sphi 0, %s123
      %s124 = sphi 0, %s121
      %s125 = sphi 0, %s124
      %s141 = sphi 0, %s125
      %s147 = sphi 0, %s149
      %s150 = sphi 0, %s147
      %s151 = sphi 0, %s150
      %s167 = sphi 0, %s151
      %s173 = sphi 0, %s175
      %s176 = sphi 0, %s173
      %s177 = sphi 0, %s176
      %s193 = sphi 0, %s177
      %s199 = sphi 0, %s201
      %s202 = sphi 0, %s199
      %s203 = sphi 0, %s202
      %s219 = sphi 0, %s203
    $region4: #{tpu_custom_call.1} parent=1 // loop_header_branch
      %20 = sbr.rel (%p18) target = $region8
    $region5: #{tpu_custom_call.1} parent=1 // loop_body
      %s22 = ssub.s32 %s17, 1
      %s23 = ssub.s32 %s17, 2
      %s30 = sadd.s32 1, %s25
      %p31 = scmp.ge.s32.totalorder %s30, 1
      %s32 = scalar_select %p31, 0, %s30
      %s33 = sadd.s32 1, %s24
      %s34 = scalar_select %p31, %s33, %s24
      %p35 = scmp.ge.s32.totalorder %s34, 2
      %s36 = scalar_select %p35, 0, %s34
      %s37 = ssub.s32 %s25, %s32
      %p38 = scmp.eq.s32.totalorder %s37, 0
      %s40 = sadd.s32 %s39, 1
      %s41 = scalar_select %p38, %s39, %s40
      %p44 = pneg %p38
      %p45 = scmp.eq.s32.totalorder %s17, 1
      %p46 = por %p44, %p45
      %p47 = scmp.ne.s32.totalorder %s39, %s42
      %p48 = scmp.eq.s32.totalorder %s17, 0
      %p49 = por %p47, %p48
      %p50 = scmp.ne.s32.totalorder %s39, %s42
      %p51 = scmp.eq.s32.totalorder %s22, 1
      %p52 = por %p50, %p51
      %p53 = scmp.ne.s32.totalorder %s42, %s43
      %p54 = scmp.eq.s32.totalorder %s22, 0
      %p55 = por %p53, %p54
      %p56 = scmp.ne.s32.totalorder %s42, %s43
      %p57 = scmp.eq.s32.totalorder %s23, 1
      %p58 = por %p56, %p57
      %p60 = scmp.ne.s32.totalorder %s43, %s59
      %p61 = scmp.eq.s32.totalorder %s23, 0
      %p62 = por %p60, %p61
      %s63 = ssub.s32 %s25, %s32
      %p64 = scmp.eq.s32.totalorder %s63, 0
      %s66 = sadd.s32 %s65, 1
      %s67 = scalar_select %p64, %s65, %s66
      %p70 = pneg %p64
      %p71 = scmp.eq.s32.totalorder %s17, 1
      %p72 = por %p70, %p71
      %p73 = scmp.ne.s32.totalorder %s65, %s68
      %p74 = scmp.eq.s32.totalorder %s17, 0
      %p75 = por %p73, %p74
      %p76 = scmp.ne.s32.totalorder %s65, %s68
      %p77 = scmp.eq.s32.totalorder %s22, 1
      %p78 = por %p76, %p77
      %p79 = scmp.ne.s32.totalorder %s68, %s69
      %p80 = scmp.eq.s32.totalorder %s22, 0
      %p81 = por %p79, %p80
      %p82 = scmp.ne.s32.totalorder %s68, %s69
      %p83 = scmp.eq.s32.totalorder %s23, 1
      %p84 = por %p82, %p83
      %p86 = scmp.ne.s32.totalorder %s69, %s85
      %p87 = scmp.eq.s32.totalorder %s23, 0
      %p88 = por %p86, %p87
      %s89 = ssub.s32 %s25, %s32
      %s90 = ssub.s32 %s24, %s36
      %s91 = sor.u32 %s89, %s90
      %p92 = scmp.eq.s32.totalorder %s91, 0
      %s94 = sadd.s32 %s93, 1
      %s95 = scalar_select %p92, %s93, %s94
      %p98 = pneg %p92
      %p99 = scmp.eq.s32.totalorder %s17, 1
      %p100 = por %p98, %p99
      %p101 = scmp.ne.s32.totalorder %s93, %s96
      %p102 = scmp.eq.s32.totalorder %s17, 0
      %p103 = por %p101, %p102
      %p104 = scmp.ne.s32.totalorder %s93, %s96
      %p105 = scmp.eq.s32.totalorder %s22, 1
      %p106 = por %p104, %p105
      %p107 = scmp.ne.s32.totalorder %s96, %s97
      %p108 = scmp.eq.s32.totalorder %s22, 0
      %p109 = por %p107, %p108
      %p110 = scmp.ne.s32.totalorder %s96, %s97
      %p111 = scmp.eq.s32.totalorder %s23, 1
      %p112 = por %p110, %p111
      %p114 = scmp.ne.s32.totalorder %s97, %s113
      %p115 = scmp.eq.s32.totalorder %s23, 0
      %p116 = por %p114, %p115
      %s117 = ssub.s32 %s25, %s32
      %s118 = ssub.s32 %s24, %s36
      %s119 = sor.u32 %s117, %s118
      %p120 = scmp.eq.s32.totalorder %s119, 0
      %s122 = sadd.s32 %s121, 1
      %s123 = scalar_select %p120, %s121, %s122
      %p126 = pneg %p120
      %p127 = scmp.eq.s32.totalorder %s17, 1
      %p128 = por %p126, %p127
      %p129 = scmp.ne.s32.totalorder %s121, %s124
      %p130 = scmp.eq.s32.totalorder %s17, 0
      %p131 = por %p129, %p130
      %p132 = scmp.ne.s32.totalorder %s121, %s124
      %p133 = scmp.eq.s32.totalorder %s22, 1
      %p134 = por %p132, %p133
      %p135 = scmp.ne.s32.totalorder %s124, %s125
      %p136 = scmp.eq.s32.totalorder %s22, 0
      %p137 = por %p135, %p136
      %p138 = scmp.ne.s32.totalorder %s124, %s125
      %p139 = scmp.eq.s32.totalorder %s23, 1
      %p140 = por %p138, %p139
      %p142 = scmp.ne.s32.totalorder %s125, %s141
      %p143 = scmp.eq.s32.totalorder %s23, 0
      %p144 = por %p142, %p143
      %s145 = ssub.s32 %s24, %s36
      %p146 = scmp.eq.s32.totalorder %s145, 0
      %s148 = sadd.s32 %s147, 1
      %s149 = scalar_select %p146, %s147, %s148
      %p152 = pneg %p146
      %p153 = scmp.eq.s32.totalorder %s17, 1
      %p154 = por %p152, %p153
      %p155 = scmp.ne.s32.totalorder %s147, %s150
      %p156 = scmp.eq.s32.totalorder %s17, 0
      %p157 = por %p155, %p156
      %p158 = scmp.ne.s32.totalorder %s147, %s150
      %p159 = scmp.eq.s32.totalorder %s22, 1
      %p160 = por %p158, %p159
      %p161 = scmp.ne.s32.totalorder %s150, %s151
      %p162 = scmp.eq.s32.totalorder %s22, 0
      %p163 = por %p161, %p162
      %p164 = scmp.ne.s32.totalorder %s150, %s151
      %p165 = scmp.eq.s32.totalorder %s23, 1
      %p166 = por %p164, %p165
      %p168 = scmp.ne.s32.totalorder %s151, %s167
      %p169 = scmp.eq.s32.totalorder %s23, 0
      %p170 = por %p168, %p169
      %s171 = ssub.s32 %s24, %s36
      %p172 = scmp.eq.s32.totalorder %s171, 0
      %s174 = sadd.s32 %s173, 1
      %s175 = scalar_select %p172, %s173, %s174
      %p178 = pneg %p172
      %p179 = scmp.eq.s32.totalorder %s17, 1
      %p180 = por %p178, %p179
      %p181 = scmp.ne.s32.totalorder %s173, %s176
      %p182 = scmp.eq.s32.totalorder %s17, 0
      %p183 = por %p181, %p182
      %p184 = scmp.ne.s32.totalorder %s173, %s176
      %p185 = scmp.eq.s32.totalorder %s22, 1
      %p186 = por %p184, %p185
      %p187 = scmp.ne.s32.totalorder %s176, %s177
      %p188 = scmp.eq.s32.totalorder %s22, 0
      %p189 = por %p187, %p188
      %p190 = scmp.ne.s32.totalorder %s176, %s177
      %p191 = scmp.eq.s32.totalorder %s23, 1
      %p192 = por %p190, %p191
      %p194 = scmp.ne.s32.totalorder %s177, %s193
      %p195 = scmp.eq.s32.totalorder %s23, 0
      %p196 = por %p194, %p195
      %s197 = ssub.s32 %s24, %s36
      %p198 = scmp.eq.s32.totalorder %s197, 0
      %s200 = sadd.s32 %s199, 1
      %s201 = scalar_select %p198, %s199, %s200
      %p204 = pneg %p198
      %p205 = scmp.eq.s32.totalorder %s17, 1
      %p206 = por %p204, %p205
      %p207 = scmp.ne.s32.totalorder %s199, %s202
      %p208 = scmp.eq.s32.totalorder %s17, 0
      %p209 = por %p207, %p208
      %p210 = scmp.ne.s32.totalorder %s199, %s202
      %p211 = scmp.eq.s32.totalorder %s22, 1
      %p212 = por %p210, %p211
      %p213 = scmp.ne.s32.totalorder %s202, %s203
      %p214 = scmp.eq.s32.totalorder %s22, 0
      %p215 = por %p213, %p214
      %p216 = scmp.ne.s32.totalorder %s202, %s203
      %p217 = scmp.eq.s32.totalorder %s23, 1
      %p218 = por %p216, %p217
      %p220 = scmp.ne.s32.totalorder %s203, %s219
      %p221 = scmp.eq.s32.totalorder %s23, 0
      %p222 = por %p220, %p221
      %p223 = scmp.le.s32.totalorder 1, %s17
      %p224 = scmp.lt.s32.totalorder %s17, 3
      %p225 = pnand %p223, %p224
      %p226 = pneg %p225
      // Predicated region
      $region9: #{tpu_custom_call.1} parent=5 // pred_check
        _
      $region10: #{tpu_custom_call.1} parent=5 // pred_check_branch
        %228 = sbr.rel (%p225) target = $region12
      $region11: #{tpu_custom_call.1} parent=5 // pred_region
        %s229 = ssub.s32 %s17, 1
        // Predicated region
        $region13: #{tpu_custom_call.1} parent=11 // pred_check
          %p230 = pneg %p55
        $region14: #{tpu_custom_call.1} parent=11 // pred_check_branch
          %232 = sbr.rel (%p230) target = $region16
        $region15: #{tpu_custom_call.1} parent=11 // pred_region
          %s233 = smul.u32 2, %s27
          %s235 = ssub.s32 256, 256
          %236 = vsyncadd [#allocation3], %s235
          %s237 = smul.addr %s233, 128
          %s238 = scalar_lea.hbm %s0, %s237
          %s240 = sshll.u32 [#allocation2], 4
          %s241 = int_to_ptr.vmem [resolvable:$true] %s240
          %243 = dma.hbm_to_vmem [thread:$0]  %s238, 256, %s241, [#allocation3]
        $region16: #{tpu_custom_call.1} parent=11 // pred_fallthru
          _
        // Predicated region
        $region17: #{tpu_custom_call.1} parent=11 // pred_check
          %p244 = pneg %p81
        $region18: #{tpu_custom_call.1} parent=11 // pred_check_branch
          %246 = sbr.rel (%p244) target = $region20
        $region19: #{tpu_custom_call.1} parent=11 // pred_region
          %s247 = smul.u32 2, %s27
          %s249 = ssub.s32 32, 32
          %250 = vsyncadd [#allocation6], %s249
          %s251 = smul.addr %s247, 16
          %s252 = scalar_lea.hbm %s1, %s251
          %s254 = sshll.u32 [#allocation5], 4
          %s255 = int_to_ptr.vmem [resolvable:$true] %s254
          %257 = dma.hbm_to_vmem [thread:$0]  %s252, 32, %s255, [#allocation6]
        $region20: #{tpu_custom_call.1} parent=11 // pred_fallthru
          _
      $region12: #{tpu_custom_call.1} parent=5 // pred_fallthru
        _
      %p258 = scmp.lt.s32.totalorder %s17, 2
      // Predicated region
      $region21: #{tpu_custom_call.1} parent=5 // pred_check
        %p259 = pneg %p258
      $region22: #{tpu_custom_call.1} parent=5 // pred_check_branch
        %261 = sbr.rel (%p259) target = $region24
      $region23: #{tpu_custom_call.1} parent=5 // pred_region
        // Predicated region
        $region25: #{tpu_custom_call.1} parent=23 // pred_check
          %p262 = pneg %p103
        $region26: #{tpu_custom_call.1} parent=23 // pred_check_branch
          %264 = sbr.rel (%p262) target = $region28
        $region27: #{tpu_custom_call.1} parent=23 // pred_region
          %s265 = sand.u32 %s17, 1
          %s266 = scalar_lea.sflag [#allocation3], %s265
          %s267 = sand.u32 %s93, 1
          %s268 = smul.addr %s267, 512
          %s269 = scalar_lea.vmem [#allocation7], %s268
          %s270 = smul.u32 32, %s25
          %s271 = smul.u32 2, %s24
          %s273 = ssub.s32 8192, 8192
          %274 = vsyncadd %s266, %s273
          %s275 = smul.addr %s270, 4
          %s276 = sadd.s32 %s271, %s275
          %s277 = smul.addr %s276, 128
          %s278 = scalar_lea.hbm %s2, %s277
          %s279 = sshll.u32 %s269, 4
          %s280 = int_to_ptr.vmem [resolvable:$true] %s279
          %285 = dma.hbm_to_vmem [thread:$0]  %s278, 8192, %s280, %s266, 512, 256, 16
        $region28: #{tpu_custom_call.1} parent=23 // pred_fallthru
          _
        // Predicated region
        $region29: #{tpu_custom_call.1} parent=23 // pred_check
          %p286 = pneg %p131
        $region30: #{tpu_custom_call.1} parent=23 // pred_check_branch
          %288 = sbr.rel (%p286) target = $region32
        $region31: #{tpu_custom_call.1} parent=23 // pred_region
          %s289 = sand.u32 %s17, 1
          %s290 = scalar_lea.sflag [#allocation3], %s289
          %s291 = sand.u32 %s121, 1
          %s292 = smul.addr %s291, 512
          %s293 = scalar_lea.vmem [#allocation8], %s292
          %s294 = smul.u32 32, %s25
          %s295 = smul.u32 2, %s24
          %s297 = ssub.s32 8192, 8192
          %298 = vsyncadd %s290, %s297
          %s299 = smul.addr %s294, 4
          %s300 = sadd.s32 %s295, %s299
          %s301 = smul.addr %s300, 128
          %s302 = scalar_lea.hbm %s3, %s301
          %s303 = sshll.u32 %s293, 4
          %s304 = int_to_ptr.vmem [resolvable:$true] %s303
          %309 = dma.hbm_to_vmem [thread:$0]  %s302, 8192, %s304, %s290, 512, 256, 16
        $region32: #{tpu_custom_call.1} parent=23 // pred_fallthru
          _
        // Predicated region
        $region33: #{tpu_custom_call.1} parent=23 // pred_check
          %p310 = pneg %p157
        $region34: #{tpu_custom_call.1} parent=23 // pred_check_branch
          %312 = sbr.rel (%p310) target = $region36
        $region35: #{tpu_custom_call.1} parent=23 // pred_region
          %s313 = smul.u32 2, %s24
          %p314 = scmp.lt.s32.totalorder %s313, 3
          %s315 = scalar_select %p314, %s313, 3
          %s316 = scalar_lea.vmem %s4, %s315
          %s317 = smul.u32 2, %s24
        $region36: #{tpu_custom_call.1} parent=23 // pred_fallthru
          _
        // Predicated region
        $region37: #{tpu_custom_call.1} parent=23 // pred_check
          %p318 = pneg %p183
        $region38: #{tpu_custom_call.1} parent=23 // pred_check_branch
          %320 = sbr.rel (%p318) target = $region40
        $region39: #{tpu_custom_call.1} parent=23 // pred_region
          %s321 = smul.u32 2, %s24
          %p322 = scmp.lt.s32.totalorder %s321, 3
          %s323 = scalar_select %p322, %s321, 3
          %s324 = scalar_lea.vmem %s5, %s323
          %s325 = smul.u32 2, %s24
        $region40: #{tpu_custom_call.1} parent=23 // pred_fallthru
          _
      $region24: #{tpu_custom_call.1} parent=5 // pred_fallthru
        _
      %p326 = scmp.le.s32.totalorder 1, %s17
      %p327 = scmp.lt.s32.totalorder %s17, 3
      %p328 = pnand %p326, %p327
      %p329 = pneg %p328
      // Predicated region
      $region41: #{tpu_custom_call.1} parent=5 // pred_check
        _
      $region42: #{tpu_custom_call.1} parent=5 // pred_check_branch
        %331 = sbr.rel (%p328) target = $region44
      $region43: #{tpu_custom_call.1} parent=5 // pred_region
        %s332 = ssub.s32 %s17, 1
        // Predicated region
        $region45: #{tpu_custom_call.1} parent=43 // pred_check
          %p333 = pneg %p55
        $region46: #{tpu_custom_call.1} parent=43 // pred_check_branch
          %335 = sbr.rel (%p333) target = $region48
        $region47: #{tpu_custom_call.1} parent=43 // pred_region
          %336 = dma.done [#allocation3], 256
        $region48: #{tpu_custom_call.1} parent=43 // pred_fallthru
          _
        // Predicated region
        $region49: #{tpu_custom_call.1} parent=43 // pred_check
          %p337 = pneg %p81
        $region50: #{tpu_custom_call.1} parent=43 // pred_check_branch
          %339 = sbr.rel (%p337) target = $region52
        $region51: #{tpu_custom_call.1} parent=43 // pred_region
          %340 = dma.done [#allocation6], 32
        $region52: #{tpu_custom_call.1} parent=43 // pred_fallthru
          _
        %s341 = sand.u32 %s22, 1
        %s342 = scalar_lea.sflag [#allocation3], %s341
        %s343 = sand.u32 %s96, 1
        %s344 = smul.addr %s343, 512
        %s345 = scalar_lea.vmem [#allocation7], %s344
        // Predicated region
        $region53: #{tpu_custom_call.1} parent=43 // pred_check
          %p346 = pneg %p109
        $region54: #{tpu_custom_call.1} parent=43 // pred_check_branch
          %348 = sbr.rel (%p346) target = $region56
        $region55: #{tpu_custom_call.1} parent=43 // pred_region
          %349 = dma.done %s342, 8192
        $region56: #{tpu_custom_call.1} parent=43 // pred_fallthru
          _
        %s350 = sand.u32 %s22, 1
        %s351 = scalar_lea.sflag [#allocation3], %s350
        %s352 = sand.u32 %s124, 1
        %s353 = smul.addr %s352, 512
        %s354 = scalar_lea.vmem [#allocation8], %s353
        // Predicated region
        $region57: #{tpu_custom_call.1} parent=43 // pred_check
          %p355 = pneg %p137
        $region58: #{tpu_custom_call.1} parent=43 // pred_check_branch
          %357 = sbr.rel (%p355) target = $region60
        $region59: #{tpu_custom_call.1} parent=43 // pred_region
          %358 = dma.done %s351, 8192
        $region60: #{tpu_custom_call.1} parent=43 // pred_fallthru
          _
        %p359 = pneg %p55
        %p360 = pneg %p52
        %p361 = pneg %p81
        %p362 = pneg %p78
        %s363 = sand.u32 %s22, 1
        %s364 = scalar_lea.sflag [#allocation3], %s363
        %s365 = sand.u32 %s96, 1
        %s366 = smul.addr %s365, 512
        %s367 = scalar_lea.vmem [#allocation7], %s366
        %p368 = pneg %p109
        %p369 = pneg %p106
        %s370 = sand.u32 %s22, 1
        %s371 = scalar_lea.sflag [#allocation3], %s370
        %s372 = sand.u32 %s124, 1
        %s373 = smul.addr %s372, 512
        %s374 = scalar_lea.vmem [#allocation8], %s373
        %p375 = pneg %p137
        %p376 = pneg %p134
        %s377 = smul.u32 2, %s26
        %p378 = scmp.lt.s32.totalorder %s377, 3
        %s379 = scalar_select %p378, %s377, 3
        %s380 = scalar_lea.vmem %s4, %s379
        %p381 = pneg %p163
        %p382 = pneg %p160
        %s383 = smul.u32 2, %s26
        %p384 = scmp.lt.s32.totalorder %s383, 3
        %s385 = scalar_select %p384, %s383, 3
        %s386 = scalar_lea.vmem %s5, %s385
        %p387 = pneg %p189
        %p388 = pneg %p186
        %p389 = pneg %p215
        %p390 = pneg %p212
        %s391 = sand.u32 %s202, 1
        %s392 = scalar_lea.sflag [#allocation4], %s391
        %s393 = sand.u32 %s202, 1
        %s394 = smul.addr %s393, 16
        %s395 = scalar_lea.vmem [#allocation9], %s394
        %s396 = smul.u32 2, %s27
        %s397 = smul.u32 2, %s27
        %s398 = smul.u32 32, %s27
        %s399 = smul.u32 2, %s26
        %s400 = smul.u32 32, %s27
        %s401 = smul.u32 2, %s26
        %s402 = smul.u32 2, %s26
        %p403 = scmp.lt.s32.totalorder %s402, 3
        %s404 = scalar_select %p403, %s402, 3
        %s405 = scalar_lea.vmem %s4, %s404
        %s406 = smul.u32 2, %s26
        %s407 = smul.u32 2, %s26
        %p408 = scmp.lt.s32.totalorder %s407, 3
        %s409 = scalar_select %p408, %s407, 3
        %s410 = scalar_lea.vmem %s5, %s409
        %s411 = smul.u32 2, %s26
        %s412 = smul.u32 2, %s26
        %p413 = scmp.eq.s32.totalorder %s27, 0
        // Predicated region
        $region61: #{tpu_custom_call.1} parent=43 // pred_check
          %p414 = pneg %p413
        $region62: #{tpu_custom_call.1} parent=43 // pred_check_branch
          %416 = sbr.rel (%p414) target = $region64
        $region63: #{tpu_custom_call.1} parent=43 // pred_region
          %417 = vst [vmem:[%s395] sm:$0xff] 0.0
          %418 = vst [vmem:[%s395 + $0x8] sm:$0xff] 0.0
        $region64: #{tpu_custom_call.1} parent=43 // pred_fallthru
          _
        %v419 = vld [vmem:[#allocation2] sm:$0xff]
        %v420 = vld [vmem:[#allocation2 + $0x8] sm:$0xff]
        %v421 = vld [vmem:[#allocation5] sm:$0x3]
        %v423 = vlaneseq
        %v424 = vshrl.u32 %v423, 7
        %v425 = vsub.s32 0, %v424
        %v426 = vrot.slane %v421, %v425
        %v427 = vlaneseq
        %v428 = vshrl.u32 %v427, 7
        %v429 = vsub.s32 1, %v428
        %v430 = vrot.slane %v421, %v429
        %v433 = vmul.f32 %v419, %v426
        %v434 = vmul.f32 %v420, %v430
        %v435 = vld [vmem:[%s395] sm:$0xff]
        %v436 = vld [vmem:[%s395 + $0x8] sm:$0xff]
        %v437 = vld [vmem:[%s345] sm:$0xff]
        %v438 = vld [vmem:[%s345 + $0x8] sm:$0xff]
        %v439 = vld [vmem:[%s345 + $0x10] sm:$0xff]
        %v440 = vld [vmem:[%s345 + $0x18] sm:$0xff]
        %v441 = vld [vmem:[%s345 + $0x20] sm:$0xff]
        %v442 = vld [vmem:[%s345 + $0x28] sm:$0xff]
        %v443 = vld [vmem:[%s345 + $0x30] sm:$0xff]
        %v444 = vld [vmem:[%s345 + $0x38] sm:$0xff]
        %v445 = vld [vmem:[%s345 + $0x40] sm:$0xff]
        %v446 = vld [vmem:[%s345 + $0x48] sm:$0xff]
        %v447 = vld [vmem:[%s345 + $0x50] sm:$0xff]
        %v448 = vld [vmem:[%s345 + $0x58] sm:$0xff]
        %v449 = vld [vmem:[%s345 + $0x60] sm:$0xff]
        %v450 = vld [vmem:[%s345 + $0x68] sm:$0xff]
        %v451 = vld [vmem:[%s345 + $0x70] sm:$0xff]
        %v452 = vld [vmem:[%s345 + $0x78] sm:$0xff]
        %v453 = vld [vmem:[%s345 + $0x80] sm:$0xff]
        %v454 = vld [vmem:[%s345 + $0x88] sm:$0xff]
        %v455 = vld [vmem:[%s345 + $0x90] sm:$0xff]
        %v456 = vld [vmem:[%s345 + $0x98] sm:$0xff]
        %v457 = vld [vmem:[%s345 + $0xa0] sm:$0xff]
        %v458 = vld [vmem:[%s345 + $0xa8] sm:$0xff]
        %v459 = vld [vmem:[%s345 + $0xb0] sm:$0xff]
        %v460 = vld [vmem:[%s345 + $0xb8] sm:$0xff]
        %v461 = vld [vmem:[%s345 + $0xc0] sm:$0xff]
        %v462 = vld [vmem:[%s345 + $0xc8] sm:$0xff]
        %v463 = vld [vmem:[%s345 + $0xd0] sm:$0xff]
        %v464 = vld [vmem:[%s345 + $0xd8] sm:$0xff]
        %v465 = vld [vmem:[%s345 + $0xe0] sm:$0xff]
        %v466 = vld [vmem:[%s345 + $0xe8] sm:$0xff]
        %v467 = vld [vmem:[%s345 + $0xf0] sm:$0xff]
        %v468 = vld [vmem:[%s345 + $0xf8] sm:$0xff]
        %v469 = vld [vmem:[%s345 + $0x100] sm:$0xff]
        %v470 = vld [vmem:[%s345 + $0x108] sm:$0xff]
        %v471 = vld [vmem:[%s345 + $0x110] sm:$0xff]
        %v472 = vld [vmem:[%s345 + $0x118] sm:$0xff]
        %v473 = vld [vmem:[%s345 + $0x120] sm:$0xff]
        %v474 = vld [vmem:[%s345 + $0x128] sm:$0xff]
        %v475 = vld [vmem:[%s345 + $0x130] sm:$0xff]
        %v476 = vld [vmem:[%s345 + $0x138] sm:$0xff]
        %v477 = vld [vmem:[%s345 + $0x140] sm:$0xff]
        %v478 = vld [vmem:[%s345 + $0x148] sm:$0xff]
        %v479 = vld [vmem:[%s345 + $0x150] sm:$0xff]
        %v480 = vld [vmem:[%s345 + $0x158] sm:$0xff]
        %v481 = vld [vmem:[%s345 + $0x160] sm:$0xff]
        %v482 = vld [vmem:[%s345 + $0x168] sm:$0xff]
        %v483 = vld [vmem:[%s345 + $0x170] sm:$0xff]
        %v484 = vld [vmem:[%s345 + $0x178] sm:$0xff]
        %v485 = vld [vmem:[%s345 + $0x180] sm:$0xff]
        %v486 = vld [vmem:[%s345 + $0x188] sm:$0xff]
        %v487 = vld [vmem:[%s345 + $0x190] sm:$0xff]
        %v488 = vld [vmem:[%s345 + $0x198] sm:$0xff]
        %v489 = vld [vmem:[%s345 + $0x1a0] sm:$0xff]
        %v490 = vld [vmem:[%s345 + $0x1a8] sm:$0xff]
        %v491 = vld [vmem:[%s345 + $0x1b0] sm:$0xff]
        %v492 = vld [vmem:[%s345 + $0x1b8] sm:$0xff]
        %v493 = vld [vmem:[%s345 + $0x1c0] sm:$0xff]
        %v494 = vld [vmem:[%s345 + $0x1c8] sm:$0xff]
        %v495 = vld [vmem:[%s345 + $0x1d0] sm:$0xff]
        %v496 = vld [vmem:[%s345 + $0x1d8] sm:$0xff]
        %v497 = vld [vmem:[%s345 + $0x1e0] sm:$0xff]
        %v498 = vld [vmem:[%s345 + $0x1e8] sm:$0xff]
        %v499 = vld [vmem:[%s345 + $0x1f0] sm:$0xff]
        %v500 = vld [vmem:[%s345 + $0x1f8] sm:$0xff]
        %v501 = vld [vmem:[%s354] sm:$0xff]
        %v502 = vld [vmem:[%s354 + $0x8] sm:$0xff]
        %v503 = vld [vmem:[%s354 + $0x10] sm:$0xff]
        %v504 = vld [vmem:[%s354 + $0x18] sm:$0xff]
        %v505 = vld [vmem:[%s354 + $0x20] sm:$0xff]
        %v506 = vld [vmem:[%s354 + $0x28] sm:$0xff]
        %v507 = vld [vmem:[%s354 + $0x30] sm:$0xff]
        %v508 = vld [vmem:[%s354 + $0x38] sm:$0xff]
        %v509 = vld [vmem:[%s354 + $0x40] sm:$0xff]
        %v510 = vld [vmem:[%s354 + $0x48] sm:$0xff]
        %v511 = vld [vmem:[%s354 + $0x50] sm:$0xff]
        %v512 = vld [vmem:[%s354 + $0x58] sm:$0xff]
        %v513 = vld [vmem:[%s354 + $0x60] sm:$0xff]
        %v514 = vld [vmem:[%s354 + $0x68] sm:$0xff]
        %v515 = vld [vmem:[%s354 + $0x70] sm:$0xff]
        %v516 = vld [vmem:[%s354 + $0x78] sm:$0xff]
        %v517 = vld [vmem:[%s354 + $0x80] sm:$0xff]
        %v518 = vld [vmem:[%s354 + $0x88] sm:$0xff]
        %v519 = vld [vmem:[%s354 + $0x90] sm:$0xff]
        %v520 = vld [vmem:[%s354 + $0x98] sm:$0xff]
        %v521 = vld [vmem:[%s354 + $0xa0] sm:$0xff]
        %v522 = vld [vmem:[%s354 + $0xa8] sm:$0xff]
        %v523 = vld [vmem:[%s354 + $0xb0] sm:$0xff]
        %v524 = vld [vmem:[%s354 + $0xb8] sm:$0xff]
        %v525 = vld [vmem:[%s354 + $0xc0] sm:$0xff]
        %v526 = vld [vmem:[%s354 + $0xc8] sm:$0xff]
        %v527 = vld [vmem:[%s354 + $0xd0] sm:$0xff]
        %v528 = vld [vmem:[%s354 + $0xd8] sm:$0xff]
        %v529 = vld [vmem:[%s354 + $0xe0] sm:$0xff]
        %v530 = vld [vmem:[%s354 + $0xe8] sm:$0xff]
        %v531 = vld [vmem:[%s354 + $0xf0] sm:$0xff]
        %v532 = vld [vmem:[%s354 + $0xf8] sm:$0xff]
        %v533 = vld [vmem:[%s354 + $0x100] sm:$0xff]
        %v534 = vld [vmem:[%s354 + $0x108] sm:$0xff]
        %v535 = vld [vmem:[%s354 + $0x110] sm:$0xff]
        %v536 = vld [vmem:[%s354 + $0x118] sm:$0xff]
        %v537 = vld [vmem:[%s354 + $0x120] sm:$0xff]
        %v538 = vld [vmem:[%s354 + $0x128] sm:$0xff]
        %v539 = vld [vmem:[%s354 + $0x130] sm:$0xff]
        %v540 = vld [vmem:[%s354 + $0x138] sm:$0xff]
        %v541 = vld [vmem:[%s354 + $0x140] sm:$0xff]
        %v542 = vld [vmem:[%s354 + $0x148] sm:$0xff]
        %v543 = vld [vmem:[%s354 + $0x150] sm:$0xff]
        %v544 = vld [vmem:[%s354 + $0x158] sm:$0xff]
        %v545 = vld [vmem:[%s354 + $0x160] sm:$0xff]
        %v546 = vld [vmem:[%s354 + $0x168] sm:$0xff]
        %v547 = vld [vmem:[%s354 + $0x170] sm:$0xff]
        %v548 = vld [vmem:[%s354 + $0x178] sm:$0xff]
        %v549 = vld [vmem:[%s354 + $0x180] sm:$0xff]
        %v550 = vld [vmem:[%s354 + $0x188] sm:$0xff]
        %v551 = vld [vmem:[%s354 + $0x190] sm:$0xff]
        %v552 = vld [vmem:[%s354 + $0x198] sm:$0xff]
        %v553 = vld [vmem:[%s354 + $0x1a0] sm:$0xff]
        %v554 = vld [vmem:[%s354 + $0x1a8] sm:$0xff]
        %v555 = vld [vmem:[%s354 + $0x1b0] sm:$0xff]
        %v556 = vld [vmem:[%s354 + $0x1b8] sm:$0xff]
        %v557 = vld [vmem:[%s354 + $0x1c0] sm:$0xff]
        %v558 = vld [vmem:[%s354 + $0x1c8] sm:$0xff]
        %v559 = vld [vmem:[%s354 + $0x1d0] sm:$0xff]
        %v560 = vld [vmem:[%s354 + $0x1d8] sm:$0xff]
        %v561 = vld [vmem:[%s354 + $0x1e0] sm:$0xff]
        %v562 = vld [vmem:[%s354 + $0x1e8] sm:$0xff]
        %v563 = vld [vmem:[%s354 + $0x1f0] sm:$0xff]
        %v564 = vld [vmem:[%s354 + $0x1f8] sm:$0xff]
        %565 = vmatprep.subr.mxu0 %v532
        %566 = vmatpush1.msra.mxu0 %v531
        %567 = vmatprep.subr.mxu0 %v530
        %568 = vmatpush1.msra.mxu0 %v529
        %569 = vmatprep.subr.mxu0 %v528
        %570 = vmatpush1.msra.mxu0 %v527
        %571 = vmatprep.subr.mxu0 %v526
        %572 = vmatpush1.msra.mxu0 %v525
        %573 = vmatprep.subr.mxu0 %v524
        %574 = vmatpush1.msra.mxu0 %v523
        %575 = vmatprep.subr.mxu0 %v522
        %576 = vmatpush1.msra.mxu0 %v521
        %577 = vmatprep.subr.mxu0 %v520
        %578 = vmatpush1.msra.mxu0 %v519
        %579 = vmatprep.subr.mxu0 %v518
        %580 = vmatpush1.msra.mxu0 %v517
        %581 = vmatprep.subr.mxu0 %v516
        %582 = vmatpush1.msra.mxu0 %v515
        %583 = vmatprep.subr.mxu0 %v514
        %584 = vmatpush1.msra.mxu0 %v513
        %585 = vmatprep.subr.mxu0 %v512
        %586 = vmatpush1.msra.mxu0 %v511
        %587 = vmatprep.subr.mxu0 %v510
        %588 = vmatpush1.msra.mxu0 %v509
        %589 = vmatprep.subr.mxu0 %v508
        %590 = vmatpush1.msra.mxu0 %v507
        %591 = vmatprep.subr.mxu0 %v506
        %592 = vmatpush1.msra.mxu0 %v505
        %593 = vmatprep.subr.mxu0 %v504
        %594 = vmatpush1.msra.mxu0 %v503
        %595 = vmatprep.subr.mxu0 %v502
        %596 = vmatpush1.msra.mxu0 %v501
        %597 = vmatprep.subr.mxu0 %v564
        %598 = vmatpush2.msra.mxu0 %v563
        %599 = vmatprep.subr.mxu0 %v562
        %600 = vmatpush2.msra.mxu0 %v561
        %601 = vmatprep.subr.mxu0 %v560
        %602 = vmatpush2.msra.mxu0 %v559
        %603 = vmatprep.subr.mxu0 %v558
        %604 = vmatpush2.msra.mxu0 %v557
        %605 = vmatprep.subr.mxu0 %v556
        %606 = vmatpush2.msra.mxu0 %v555
        %607 = vmatprep.subr.mxu0 %v554
        %608 = vmatpush2.msra.mxu0 %v553
        %609 = vmatprep.subr.mxu0 %v552
        %610 = vmatpush2.msra.mxu0 %v551
        %611 = vmatprep.subr.mxu0 %v550
        %612 = vmatpush2.msra.mxu0 %v549
        %613 = vmatprep.subr.mxu0 %v548
        %614 = vmatpush2.msra.mxu0 %v547
        %615 = vmatprep.subr.mxu0 %v546
        %616 = vmatpush2.msra.mxu0 %v545
        %617 = vmatprep.subr.mxu0 %v544
        %618 = vmatpush2.msra.mxu0 %v543
        %619 = vmatprep.subr.mxu0 %v542
        %620 = vmatpush2.msra.mxu0 %v541
        %621 = vmatprep.subr.mxu0 %v540
        %622 = vmatpush2.msra.mxu0 %v539
        %623 = vmatprep.subr.mxu0 %v538
        %624 = vmatpush2.msra.mxu0 %v537
        %625 = vmatprep.subr.mxu0 %v536
        %626 = vmatpush2.msra.mxu0 %v535
        %627 = vmatprep.subr.mxu0 %v534
        %628 = vmatpush2.msra.mxu0 %v533
        %629 = vmatprep.mubr.f32.mxu0 %v434
        %630 = vmatmul.mubr.f32.gmra.mxu0 %v433
        %v631 = vpop.f32.mrf.mxu0
        %v632 = vadd.f32 0.0, %v631
        %v633 = vpop.f32.mrf.mxu0
        %v634 = vadd.f32 0.0, %v633
        %635 = vdwg.mxu0
        %v636 = vld [vmem:[%s405] sm:$0x3]
        %v638 = vlaneseq
        %v639 = vshrl.u32 %v638, 7
        %v640 = vsub.s32 0, %v639
        %v641 = vrot.slane %v636, %v640
        %v642 = vlaneseq
        %v643 = vshrl.u32 %v642, 7
        %v644 = vsub.s32 1, %v643
        %v645 = vrot.slane %v636, %v644
        %v648 = vmul.f32 %v632, %v641
        %v649 = vmul.f32 %v634, %v645
        %650 = vmatprep.subr.mxu0 %v468
        %651 = vmatpush1.msra.mxu0 %v467
        %652 = vmatprep.subr.mxu0 %v466
        %653 = vmatpush1.msra.mxu0 %v465
        %654 = vmatprep.subr.mxu0 %v464
        %655 = vmatpush1.msra.mxu0 %v463
        %656 = vmatprep.subr.mxu0 %v462
        %657 = vmatpush1.msra.mxu0 %v461
        %658 = vmatprep.subr.mxu0 %v460
        %659 = vmatpush1.msra.mxu0 %v459
        %660 = vmatprep.subr.mxu0 %v458
        %661 = vmatpush1.msra.mxu0 %v457
        %662 = vmatprep.subr.mxu0 %v456
        %663 = vmatpush1.msra.mxu0 %v455
        %664 = vmatprep.subr.mxu0 %v454
        %665 = vmatpush1.msra.mxu0 %v453
        %666 = vmatprep.subr.mxu0 %v452
        %667 = vmatpush1.msra.mxu0 %v451
        %668 = vmatprep.subr.mxu0 %v450
        %669 = vmatpush1.msra.mxu0 %v449
        %670 = vmatprep.subr.mxu0 %v448
        %671 = vmatpush1.msra.mxu0 %v447
        %672 = vmatprep.subr.mxu0 %v446
        %673 = vmatpush1.msra.mxu0 %v445
        %674 = vmatprep.subr.mxu0 %v444
        %675 = vmatpush1.msra.mxu0 %v443
        %676 = vmatprep.subr.mxu0 %v442
        %677 = vmatpush1.msra.mxu0 %v441
        %678 = vmatprep.subr.mxu0 %v440
        %679 = vmatpush1.msra.mxu0 %v439
        %680 = vmatprep.subr.mxu0 %v438
        %681 = vmatpush1.msra.mxu0 %v437
        %682 = vmatprep.subr.mxu0 %v500
        %683 = vmatpush2.msra.mxu0 %v499
        %684 = vmatprep.subr.mxu0 %v498
        %685 = vmatpush2.msra.mxu0 %v497
        %686 = vmatprep.subr.mxu0 %v496
        %687 = vmatpush2.msra.mxu0 %v495
        %688 = vmatprep.subr.mxu0 %v494
        %689 = vmatpush2.msra.mxu0 %v493
        %690 = vmatprep.subr.mxu0 %v492
        %691 = vmatpush2.msra.mxu0 %v491
        %692 = vmatprep.subr.mxu0 %v490
        %693 = vmatpush2.msra.mxu0 %v489
        %694 = vmatprep.subr.mxu0 %v488
        %695 = vmatpush2.msra.mxu0 %v487
        %696 = vmatprep.subr.mxu0 %v486
        %697 = vmatpush2.msra.mxu0 %v485
        %698 = vmatprep.subr.mxu0 %v484
        %699 = vmatpush2.msra.mxu0 %v483
        %700 = vmatprep.subr.mxu0 %v482
        %701 = vmatpush2.msra.mxu0 %v481
        %702 = vmatprep.subr.mxu0 %v480
        %703 = vmatpush2.msra.mxu0 %v479
        %704 = vmatprep.subr.mxu0 %v478
        %705 = vmatpush2.msra.mxu0 %v477
        %706 = vmatprep.subr.mxu0 %v476
        %707 = vmatpush2.msra.mxu0 %v475
        %708 = vmatprep.subr.mxu0 %v474
        %709 = vmatpush2.msra.mxu0 %v473
        %710 = vmatprep.subr.mxu0 %v472
        %711 = vmatpush2.msra.mxu0 %v471
        %712 = vmatprep.subr.mxu0 %v470
        %713 = vmatpush2.msra.mxu0 %v469
        %714 = vmatprep.mubr.f32.mxu0 %v420
        %715 = vmatmul.mubr.f32.gmra.mxu0 %v419
        %v716 = vpop.f32.mrf.mxu0
        %v717 = vadd.f32 %v648, %v716
        %v718 = vpop.f32.mrf.mxu0
        %v719 = vadd.f32 %v649, %v718
        %720 = vdwg.mxu0
        %v721 = vadd.f32 %v435, %v717
        %v722 = vadd.f32 %v436, %v719
        %723 = vst [vmem:[%s395] sm:$0xff] %v721
        %724 = vst [vmem:[%s395 + $0x8] sm:$0xff] %v722
        // Predicated region
        $region65: #{tpu_custom_call.1} parent=43 // pred_check
          %p725 = pneg %p413
        $region66: #{tpu_custom_call.1} parent=43 // pred_check_branch
          %727 = sbr.rel (%p725) target = $region68
        $region67: #{tpu_custom_call.1} parent=43 // pred_region
          %v728 = vld [vmem:[%s395] sm:$0xff]
          %v729 = vld [vmem:[%s395 + $0x8] sm:$0xff]
          %v730 = vld [vmem:[%s410] sm:$0x3]
          %v732 = vlaneseq
          %v733 = vshrl.u32 %v732, 7
          %v734 = vsub.s32 0, %v733
          %v735 = vrot.slane %v730, %v734
          %v736 = vlaneseq
          %v737 = vshrl.u32 %v736, 7
          %v738 = vsub.s32 1, %v737
          %v739 = vrot.slane %v730, %v738
          %v742 = vadd.f32 %v728, %v735
          %v743 = vadd.f32 %v729, %v739
          %744 = vst [vmem:[%s395] sm:$0xff] %v742
          %745 = vst [vmem:[%s395 + $0x8] sm:$0xff] %v743
        $region68: #{tpu_custom_call.1} parent=43 // pred_fallthru
          _
        %s746 = sand.u32 %s202, 1
        %s747 = scalar_lea.sflag [#allocation4], %s746
        %s748 = sand.u32 %s202, 1
        %s749 = smul.addr %s748, 16
        %s750 = scalar_lea.vmem [#allocation9], %s749
        // Predicated region
        $region69: #{tpu_custom_call.1} parent=43 // pred_check
          %p751 = pneg %p212
        $region70: #{tpu_custom_call.1} parent=43 // pred_check_branch
          %753 = sbr.rel (%p751) target = $region72
        $region71: #{tpu_custom_call.1} parent=43 // pred_region
          %s754 = smul.u32 2, %s26
          %s756 = ssub.s32 256, 256
          %757 = vsyncadd %s747, %s756
          %s758 = smul.addr %s754, 128
          %s759 = scalar_lea.hbm %s6, %s758
          %s761 = sshll.u32 %s750, 4
          %s762 = int_to_ptr.vmem [resolvable:$true] %s761
          %764 = dma.vmem_to_hbm [thread:$0]  %s762, 256, %s759, %s747
        $region72: #{tpu_custom_call.1} parent=43 // pred_fallthru
          _
      $region44: #{tpu_custom_call.1} parent=5 // pred_fallthru
        _
      %p765 = scmp.le.s32.totalorder 2, %s17
      // Predicated region
      $region73: #{tpu_custom_call.1} parent=5 // pred_check
        %p766 = pneg %p765
      $region74: #{tpu_custom_call.1} parent=5 // pred_check_branch
        %768 = sbr.rel (%p766) target = $region76
      $region75: #{tpu_custom_call.1} parent=5 // pred_region
        %s769 = ssub.s32 %s17, 2
        // Predicated region
        $region77: #{tpu_custom_call.1} parent=75 // pred_check
          %p770 = pneg %p218
        $region78: #{tpu_custom_call.1} parent=75 // pred_check_branch
          %772 = sbr.rel (%p770) target = $region80
        $region79: #{tpu_custom_call.1} parent=75 // pred_region
          %s773 = sand.u32 %s203, 1
          %s774 = scalar_lea.sflag [#allocation4], %s773
          %s775 = sand.u32 %s203, 1
          %s776 = smul.addr %s775, 16
          %s777 = scalar_lea.vmem [#allocation9], %s776
          %778 = dma.done %s774, 256
        $region80: #{tpu_custom_call.1} parent=75 // pred_fallthru
          _
      $region76: #{tpu_custom_call.1} parent=5 // pred_fallthru
        _
    $region6: #{tpu_custom_call.1} parent=1 // loop_footer
      %s21 = sadd.s32 1, %s17
    $region7: #{tpu_custom_call.1} parent=1 // loop_footer_branch
      %16 = sbr.rel target = $region3
    $region8: #{tpu_custom_call.1} parent=1 // loop_exit
      _
    %779 = vsyncpa [#allocation3], 1
    %s780 = scalar_lea.sflag [#allocation3], 1
    %781 = vsyncpa %s780, 1
    %782 = vsyncpa [#allocation6], 1
    %783 = vsyncpa [#allocation4], 1
    %s784 = scalar_lea.sflag [#allocation4], 1
    %785 = vsyncpa %s784, 1

</llo_original>
